<compile_context>
chip_gen: v6e
topology: v6e:2x2x1
jax: 0.10.0
libtpu: 0.0.40
codegen_flags: <defaults>
</compile_context>

<pallas_src>
import functools

import numpy as np
import jax
import jax.numpy as jnp
from jax import lax
from jax.experimental import pallas as pl
from jax.experimental.pallas import tpu as pltpu


def _round_up(x, m):
    return ((x + m - 1) // m) * m


def _softplus(x):
    # Numerically stable softplus (== torch.log1p(torch.exp(x)) mathematically).
    return jnp.maximum(x, 0.0) + jnp.log1p(jnp.exp(-jnp.abs(x)))


# -----------------------------------------------------------------------------
# Gabor filter bank (reparameterized psi sample + rotated Gaussian * cosine).
# Plain JAX (tiny, fuses in XLA), emitted directly in the (OC, K*K*C) layout
# (row order kh, kw, c) the conv kernel consumes.
# -----------------------------------------------------------------------------
def build_gabor_bank(psi_mu, psi_rho, eps, theta, lamda, sigma, gamma,
                     kernel_size):
    OC, IC = theta.shape
    assert kernel_size % 2 == 1, "BayesianGabor2D requires an odd kernel_size"
    half = kernel_size // 2
    yg, xg = np.mgrid[-half:half + 1, -half:half + 1]
    xg = jnp.asarray(xg, jnp.float32)[None, None]          # (1,1,K,K)
    yg = jnp.asarray(yg, jnp.float32)[None, None]

    psi = (psi_mu + eps * _softplus(psi_rho))[:, :, None, None]
    th = (theta - np.pi)[:, :, None, None]
    sig_x = sigma[:, :, None, None]
    sig_y = (sigma / gamma)[:, :, None, None]
    lam = lamda[:, :, None, None]

    rot_x = xg * jnp.cos(th) + yg * jnp.sin(th)
    rot_y = -xg * jnp.sin(th) + yg * jnp.cos(th)
    g = jnp.exp(-0.5 * (rot_x ** 2 / sig_x ** 2 + rot_y ** 2 / sig_y ** 2))
    g = g / (2.0 * np.pi * sig_x * sig_y)
    g = g * jnp.cos(2.0 * np.pi / lam * rot_x + psi)       # (OC, IC, K, K)

    # (OC, IC, K, K) -> (OC, K, K, IC) -> (OC, K*K*IC): row order (kh, kw, c)
    return g.transpose(0, 2, 3, 1).reshape(OC, kernel_size * kernel_size * IC)


# -----------------------------------------------------------------------------
# Fused conv kernel: register-resident patch assembly + MXU matmul per chunk.
# -----------------------------------------------------------------------------
def _gabor_conv_kernel(w_ref, xa_ref, xh_ref, o_ref, xwin_ref, *,
                       tap_offsets, in_channels, kd_pad, block_m, halo, chunk):
    C, bm = in_channels, block_m
    n_zero = kd_pad - len(tap_offsets) * C

    # Stage the current (C, bm) block plus its (C, halo) halo contiguously.
    # Both stores are lane-aligned (bm is a multiple of 128) and tiny.
    xwin_ref[:, :bm] = xa_ref[...]
    xwin_ref[:, bm:] = xh_ref[...]

    w = w_ref[...]                                         # (OC_pad, Kd_pad)
    # Per 128-lane chunk: assemble the (Kd_pad, chunk) patch in registers from
    # K*K static lane-shifted slices (shift work lands on the XLU), then one
    # MXU matmul with f32 accumulation and a lane-dense aligned output store.
    for c0 in range(0, bm, chunk):
        win = xwin_ref[:, c0:c0 + chunk + halo]            # aligned load
        parts = [win[:, off:off + chunk] for off in tap_offsets]
        if n_zero:
            parts.append(jnp.zeros((n_zero, chunk), win.dtype))
        patch = jnp.concatenate(parts, axis=0)             # (Kd_pad, chunk)
        o_ref[:, c0:c0 + chunk] = jnp.dot(
            w, patch, preferred_element_type=jnp.float32).astype(o_ref.dtype)


def bayesian_gabor_conv2d(x, w_flat, *, kernel_size, stride=1, padding=0,
                          dilation=1, bias=None, compute_dtype=jnp.bfloat16,
                          block_m=1024, chunk=128):
    """conv2d(x, w) where w is pre-flattened to (OC, K*K*C), rows = (kh,kw,c).

    compute_dtype=bfloat16 keeps f32 accumulation; on v5e (no native bf16 VPU)
    pass compute_dtype=jnp.float32 if bf16 copies regress.
    """
    N, C, H, W = x.shape
    OC, Kd = w_flat.shape
    K = kernel_size
    assert Kd == K * K * C, "weight bank must be (OC, K*K*C), rows (kh, kw, c)"

    # Spatial zero-pad, flatten each image to (C, Hp*Wp).  On the stride-1
    # output grid, tap (kh, kw) is a constant flat shift of (kh*Wp + kw)*dil.
    xp = jnp.pad(x, ((0, 0), (0, 0), (padding, padding), (padding, padding)))
    Hp, Wp = H + 2 * padding, W + 2 * padding
    OH1 = Hp - dilation * (K - 1)          # stride-1 output height
    OW1 = Wp - dilation * (K - 1)          # stride-1 output width
    assert OH1 > 0 and OW1 > 0, "kernel/dilation larger than padded input"

    tap_offsets = tuple((kh * Wp + kw) * dilation
                        for kh in range(K) for kw in range(K))
    max_shift = tap_offsets[-1]
    halo = _round_up(max(max_shift, 1), 128)               # halo block width

    L = Hp * Wp                                            # per-image flat len
    # bm: multiple of halo (hence of 128/chunk); aim for >= 2 tiles per image
    # so the parallel grid can shard across both v7x TensorCores even at N==1.
    bm = min(block_m, _round_up(max(-(-L // 2), chunk), halo))
    bm = _round_up(max(bm, halo, chunk), halo)
    assert bm % chunk == 0 and bm % halo == 0
    nt = -(-L // bm)                                       # spatial tiles/image
    L_pad = nt * bm
    L_in = L_pad + halo                                    # input incl. halo

    Kd_pad = _round_up(Kd, 128) if Kd <= 128 else _round_up(Kd, 8)
    OC_pad = _round_up(OC, 8)

    xf = xp.astype(compute_dtype).reshape(N, C, L)
    # Zero tail: halo reads past each image's end only feed output columns
    # that the [:OH1, :OW1] slice discards (discard invariant preserved).
    xf = jnp.pad(xf, ((0, 0), (0, 0), (0, L_in - L)))

    wp = jnp.zeros((OC_pad, Kd_pad), compute_dtype)
    wp = wp.at[:OC, :Kd].set(w_flat.astype(compute_dtype))

    kernel = functools.partial(
        _gabor_conv_kernel, tap_offsets=tap_offsets, in_channels=C,
        kd_pad=Kd_pad, block_m=bm, halo=halo, chunk=chunk)

    blk = bm // halo
    out_flat = pl.pallas_call(
        kernel,
        out_shape=jax.ShapeDtypeStruct((N, OC_pad, L_pad), jnp.float32),
        grid=(N, nt),
        in_specs=[
            pl.BlockSpec((OC_pad, Kd_pad), lambda n, t: (0, 0)),      # resident
            pl.BlockSpec((None, C, bm), lambda n, t: (n, 0, t)),      # main
            pl.BlockSpec((None, C, halo),
                         lambda n, t: (n, 0, (t + 1) * blk)),         # halo only
        ],
        out_specs=pl.BlockSpec((None, OC_pad, bm), lambda n, t: (n, 0, t)),
        scratch_shapes=[pltpu.VMEM((C, bm + halo), compute_dtype)],
        compiler_params=pltpu.CompilerParams(
            dimension_semantics=("parallel", "parallel"),
            vmem_limit_bytes=32 * 1024 * 1024),
    )(wp, xf, xf)

    # Already (N, OC, spatial): no full-tensor transpose in the epilogue.
    out = out_flat[:, :OC, :L].reshape(N, OC, Hp, Wp)[:, :, :OH1, :OW1]
    if stride > 1:
        # TODO(synk): strided fast path (compute only every stride-th column);
        # subsampling the stride-1 grid is correct but does stride**2 extra work.
        out = out[:, :, ::stride, ::stride]
    if bias is not None:
        out = out + bias[None, :, None, None]
    return out


# -----------------------------------------------------------------------------
# Full BayesianGabor2D forward (groups=1; sampled psi via explicit eps input).
# -----------------------------------------------------------------------------
def bayesian_gabor2d_forward(x, psi_mu, psi_rho, eps, theta, lamda, sigma,
                             gamma, *, kernel_size, stride=1, padding=0,
                             dilation=1, bias=None,
                             compute_dtype=jnp.bfloat16, block_m=1024):
    w_flat = build_gabor_bank(psi_mu, psi_rho, eps, theta, lamda, sigma, gamma,
                              kernel_size)
    return bayesian_gabor_conv2d(
        x, w_flat, kernel_size=kernel_size, stride=stride, padding=padding,
        dilation=dilation, bias=bias, compute_dtype=compute_dtype,
        block_m=block_m)
    # TODO(synk): kl_loss() (analytic KL between Gaussians) is a training-time
    # scalar reduction, not part of the forward hot path; not implemented.


if __name__ == "__main__":
    # Small deterministic configuration consistent with the module.
    N, IC, H, W = 2, 4, 16, 16
    OC, K = 8, 5
    stride, padding, dilation = 1, 2, 1
    priors = {"prior_mu": 0.0, "prior_sigma": 0.1,
              "posterior_mu_initial": (0.0, 0.1),
              "posterior_rho_initial": (-3.0, 0.1)}

    key = jax.random.PRNGKey(0)
    ks = jax.random.split(key, 8)
    mu0, mu_s = priors["posterior_mu_initial"]
    rho0, rho_s = priors["posterior_rho_initial"]
    psi_mu = mu0 + mu_s * jax.random.normal(ks[0], (OC, IC), jnp.float32)
    psi_rho = rho0 + rho_s * jax.random.normal(ks[1], (OC, IC), jnp.float32)
    theta = jax.random.uniform(ks[2], (OC, IC), jnp.float32)
    sigma = 5.0 + 1.5 * jax.random.normal(ks[3], (OC, IC), jnp.float32)
    lamda = 5.0 + 1.5 * jax.random.normal(ks[4], (OC, IC), jnp.float32)
    gamma = 1.5 + 0.4 * jax.random.normal(ks[5], (OC, IC), jnp.float32)
    eps = jax.random.normal(ks[6], (OC, IC), jnp.float32)   # reparam noise
    x = jax.random.normal(ks[7], (N, IC, H, W), jnp.float32)

    # --- pure-JAX reference (same math, XLA conv at HIGHEST precision) ---
    psi = psi_mu + eps * (jnp.maximum(psi_rho, 0.0)
                          + jnp.log1p(jnp.exp(-jnp.abs(psi_rho))))
    half = K // 2
    yy, xx = np.mgrid[-half:half + 1, -half:half + 1]
    xx = jnp.asarray(xx, jnp.float32)
    yy = jnp.asarray(yy, jnp.float32)
    th = (theta - np.pi)[:, :, None, None]
    rot_x = xx * jnp.cos(th) + yy * jnp.sin(th)
    rot_y = -xx * jnp.sin(th) + yy * jnp.cos(th)
    sx = sigma[:, :, None, None]
    sy = (sigma / gamma)[:, :, None, None]
    g = jnp.exp(-0.5 * (rot_x ** 2 / sx ** 2 + rot_y ** 2 / sy ** 2))
    g = g / (2 * np.pi * sx * sy)
    g = g * jnp.cos(2 * np.pi / lamda[:, :, None, None] * rot_x
                    + psi[:, :, None, None])
    ref = lax.conv_general_dilated(
        x, g, (stride, stride), [(padding, padding)] * 2,
        rhs_dilation=(dilation, dilation),
        dimension_numbers=("NCHW", "OIHW", "NCHW"),
        precision=lax.Precision.HIGHEST)

    # --- f32 compute path (tight tolerance) ---
    fwd_f32 = jax.jit(functools.partial(
        bayesian_gabor2d_forward, kernel_size=K, stride=stride,
        padding=padding, dilation=dilation, compute_dtype=jnp.float32))
    out_f32 = jax.block_until_ready(
        fwd_f32(x, psi_mu, psi_rho, eps, theta, lamda, sigma, gamma))
    assert out_f32.shape == (N, OC, H, W), out_f32.shape
    assert jnp.allclose(out_f32, ref, atol=2e-3, rtol=2e-3), \
        float(jnp.max(jnp.abs(out_f32 - ref)))

    # --- bf16 compute path (default; looser tolerance for operand rounding) ---
    fwd_bf16 = jax.jit(functools.partial(
        bayesian_gabor2d_forward, kernel_size=K, stride=stride,
        padding=padding, dilation=dilation))
    out_bf16 = jax.block_until_ready(
        fwd_bf16(x, psi_mu, psi_rho, eps, theta, lamda, sigma, gamma))
    assert out_bf16.shape == (N, OC, H, W), out_bf16.shape
    assert jnp.allclose(out_bf16, ref, atol=1e-2, rtol=5e-2), \
        float(jnp.max(jnp.abs(out_bf16 - ref)))

    print("KERNEL_OK")
</pallas_src>

<mosaic_0001>
module attributes {stable_mosaic.version = 11 : i64} {
  func.func @_gabor_conv_kernel(%arg0: i32, %arg1: i32, %arg2: memref<8x128xf32, #tpu.memory_space<vmem>>, %arg3: memref<1x4x256xf32, #tpu.memory_space<vmem>>, %arg4: memref<1x4x128xf32, #tpu.memory_space<vmem>>, %arg5: memref<1x8x256xf32, #tpu.memory_space<vmem>>, %arg6: memref<4x384xf32, #tpu.memory_space<vmem>>) attributes {dimension_semantics = [#tpu.dimension_semantics<parallel>, #tpu.dimension_semantics<parallel>], iteration_bounds = array<i64: 2, 2>, scalar_prefetch = 0 : i64, scratch_operands = 1 : i64, tpu.core_type = #tpu.core_type<tc>, window_params = [{pipeline_mode = #tpu.pipeline_mode<synchronous>, transform_indices = @transform_0, window_bounds = array<i64: 8, 128>}, {transform_indices = @transform_1, window_bounds = array<i64: 1, 4, 256>}, {transform_indices = @transform_2, window_bounds = array<i64: 1, 4, 128>}, {transform_indices = @transform_3, window_bounds = array<i64: 1, 8, 256>}]} {
    %c0 = arith.constant 0 : index
    %c0_0 = arith.constant 0 : index
    %c0_1 = arith.constant 0 : index
    %0 = vector.load %arg3[%c0, %c0_0, %c0_1] : memref<1x4x256xf32, #tpu.memory_space<vmem>>, vector<1x4x256xf32>
    %1 = vector.shape_cast %0 : vector<1x4x256xf32> to vector<4x256xf32>
    %c0_2 = arith.constant 0 : index
    %c0_3 = arith.constant 0 : index
    %2 = vector.load %arg6[%c0_2, %c0_3] : memref<4x384xf32, #tpu.memory_space<vmem>>, vector<4x256xf32>
    tpu.vector_store %arg6[%c0_2, %c0_3], %1 {strides = array<i32>} : memref<4x384xf32, #tpu.memory_space<vmem>>, vector<4x256xf32>,
    %c0_4 = arith.constant 0 : index
    %c0_5 = arith.constant 0 : index
    %c0_6 = arith.constant 0 : index
    %3 = vector.load %arg4[%c0_4, %c0_5, %c0_6] : memref<1x4x128xf32, #tpu.memory_space<vmem>>, vector<1x4x128xf32>
    %4 = vector.shape_cast %3 : vector<1x4x128xf32> to vector<4x128xf32>
    %c0_7 = arith.constant 0 : index
    %c256 = arith.constant 256 : index
    %5 = vector.load %arg6[%c0_7, %c256] : memref<4x384xf32, #tpu.memory_space<vmem>>, vector<4x128xf32>
    tpu.vector_store %arg6[%c0_7, %c256], %4 {strides = array<i32>} : memref<4x384xf32, #tpu.memory_space<vmem>>, vector<4x128xf32>,
    %c0_8 = arith.constant 0 : index
    %c0_9 = arith.constant 0 : index
    %6 = vector.load %arg2[%c0_8, %c0_9] : memref<8x128xf32, #tpu.memory_space<vmem>>, vector<8x128xf32>
    %c0_10 = arith.constant 0 : index
    %c0_11 = arith.constant 0 : index
    %7 = vector.load %arg6[%c0_10, %c0_11] : memref<4x384xf32, #tpu.memory_space<vmem>>, vector<4x256xf32>
    %8 = vector.extract_strided_slice %7 {offsets = [0, 0], sizes = [4, 128], strides = [1, 1]} : vector<4x256xf32> to vector<4x128xf32>
    %9 = vector.extract_strided_slice %7 {offsets = [0, 1], sizes = [4, 128], strides = [1, 1]} : vector<4x256xf32> to vector<4x128xf32>
    %10 = vector.extract_strided_slice %7 {offsets = [0, 2], sizes = [4, 128], strides = [1, 1]} : vector<4x256xf32> to vector<4x128xf32>
    %11 = vector.extract_strided_slice %7 {offsets = [0, 3], sizes = [4, 128], strides = [1, 1]} : vector<4x256xf32> to vector<4x128xf32>
    %12 = vector.extract_strided_slice %7 {offsets = [0, 4], sizes = [4, 128], strides = [1, 1]} : vector<4x256xf32> to vector<4x128xf32>
    %13 = vector.extract_strided_slice %7 {offsets = [0, 20], sizes = [4, 128], strides = [1, 1]} : vector<4x256xf32> to vector<4x128xf32>
    %14 = vector.extract_strided_slice %7 {offsets = [0, 21], sizes = [4, 128], strides = [1, 1]} : vector<4x256xf32> to vector<4x128xf32>
    %15 = vector.extract_strided_slice %7 {offsets = [0, 22], sizes = [4, 128], strides = [1, 1]} : vector<4x256xf32> to vector<4x128xf32>
    %16 = vector.extract_strided_slice %7 {offsets = [0, 23], sizes = [4, 128], strides = [1, 1]} : vector<4x256xf32> to vector<4x128xf32>
    %17 = vector.extract_strided_slice %7 {offsets = [0, 24], sizes = [4, 128], strides = [1, 1]} : vector<4x256xf32> to vector<4x128xf32>
    %18 = vector.extract_strided_slice %7 {offsets = [0, 40], sizes = [4, 128], strides = [1, 1]} : vector<4x256xf32> to vector<4x128xf32>
    %19 = vector.extract_strided_slice %7 {offsets = [0, 41], sizes = [4, 128], strides = [1, 1]} : vector<4x256xf32> to vector<4x128xf32>
    %20 = vector.extract_strided_slice %7 {offsets = [0, 42], sizes = [4, 128], strides = [1, 1]} : vector<4x256xf32> to vector<4x128xf32>
    %21 = vector.extract_strided_slice %7 {offsets = [0, 43], sizes = [4, 128], strides = [1, 1]} : vector<4x256xf32> to vector<4x128xf32>
    %22 = vector.extract_strided_slice %7 {offsets = [0, 44], sizes = [4, 128], strides = [1, 1]} : vector<4x256xf32> to vector<4x128xf32>
    %23 = vector.extract_strided_slice %7 {offsets = [0, 60], sizes = [4, 128], strides = [1, 1]} : vector<4x256xf32> to vector<4x128xf32>
    %24 = vector.extract_strided_slice %7 {offsets = [0, 61], sizes = [4, 128], strides = [1, 1]} : vector<4x256xf32> to vector<4x128xf32>
    %25 = vector.extract_strided_slice %7 {offsets = [0, 62], sizes = [4, 128], strides = [1, 1]} : vector<4x256xf32> to vector<4x128xf32>
    %26 = vector.extract_strided_slice %7 {offsets = [0, 63], sizes = [4, 128], strides = [1, 1]} : vector<4x256xf32> to vector<4x128xf32>
    %27 = vector.extract_strided_slice %7 {offsets = [0, 64], sizes = [4, 128], strides = [1, 1]} : vector<4x256xf32> to vector<4x128xf32>
    %28 = vector.extract_strided_slice %7 {offsets = [0, 80], sizes = [4, 128], strides = [1, 1]} : vector<4x256xf32> to vector<4x128xf32>
    %29 = vector.extract_strided_slice %7 {offsets = [0, 81], sizes = [4, 128], strides = [1, 1]} : vector<4x256xf32> to vector<4x128xf32>
    %30 = vector.extract_strided_slice %7 {offsets = [0, 82], sizes = [4, 128], strides = [1, 1]} : vector<4x256xf32> to vector<4x128xf32>
    %31 = vector.extract_strided_slice %7 {offsets = [0, 83], sizes = [4, 128], strides = [1, 1]} : vector<4x256xf32> to vector<4x128xf32>
    %32 = vector.extract_strided_slice %7 {offsets = [0, 84], sizes = [4, 128], strides = [1, 1]} : vector<4x256xf32> to vector<4x128xf32>
    %cst = arith.constant 0.000000e+00 : f32
    %33 = vector.broadcast %cst : f32 to vector<28x128xf32>
    %34 = tpu.concatenate %8, %9, %10, %11, %12, %13, %14, %15, %16, %17, %18, %19, %20, %21, %22, %23 in 0 : vector<4x128xf32>, vector<4x128xf32>, vector<4x128xf32>, vector<4x128xf32>, vector<4x128xf32>, vector<4x128xf32>, vector<4x128xf32>, vector<4x128xf32>, vector<4x128xf32>, vector<4x128xf32>, vector<4x128xf32>, vector<4x128xf32>, vector<4x128xf32>, vector<4x128xf32>, vector<4x128xf32>, vector<4x128xf32> -> vector<64x128xf32>
    %35 = tpu.concatenate %24, %25, %26, %27, %28, %29, %30, %31, %32, %33 in 0 : vector<4x128xf32>, vector<4x128xf32>, vector<4x128xf32>, vector<4x128xf32>, vector<4x128xf32>, vector<4x128xf32>, vector<4x128xf32>, vector<4x128xf32>, vector<4x128xf32>, vector<28x128xf32> -> vector<64x128xf32>
    %36 = tpu.concatenate %34, %35 in 0 : vector<64x128xf32>, vector<64x128xf32> -> vector<128x128xf32>
    %cst_12 = arith.constant dense<0.000000e+00> : vector<8x128xf32>
    %37 = tpu.matmul %6, %36, %cst_12 {dimension_numbers = #tpu.dot_dimension_numbers<[1], [0], [0], [1], [0, 0, 1, 1], [], []>} : vector<8x128xf32>, vector<128x128xf32>, vector<8x128xf32> -> vector<8x128xf32>
    %c0_13 = arith.constant 0 : index
    %c0_14 = arith.constant 0 : index
    %c0_15 = arith.constant 0 : index
    %38 = vector.load %arg5[%c0_13, %c0_14, %c0_15] : memref<1x8x256xf32, #tpu.memory_space<vmem>>, vector<1x8x128xf32>
    %39 = vector.shape_cast %38 : vector<1x8x128xf32> to vector<8x128xf32>
    %40 = vector.shape_cast %37 : vector<8x128xf32> to vector<1x8x128xf32>
    tpu.vector_store %arg5[%c0_13, %c0_14, %c0_15], %40 {strides = array<i32>} : memref<1x8x256xf32, #tpu.memory_space<vmem>>, vector<1x8x128xf32>,
    %c0_16 = arith.constant 0 : index
    %c128 = arith.constant 128 : index
    %41 = vector.load %arg6[%c0_16, %c128] : memref<4x384xf32, #tpu.memory_space<vmem>>, vector<4x256xf32>
    %42 = vector.extract_strided_slice %41 {offsets = [0, 0], sizes = [4, 128], strides = [1, 1]} : vector<4x256xf32> to vector<4x128xf32>
    %43 = vector.extract_strided_slice %41 {offsets = [0, 1], sizes = [4, 128], strides = [1, 1]} : vector<4x256xf32> to vector<4x128xf32>
    %44 = vector.extract_strided_slice %41 {offsets = [0, 2], sizes = [4, 128], strides = [1, 1]} : vector<4x256xf32> to vector<4x128xf32>
    %45 = vector.extract_strided_slice %41 {offsets = [0, 3], sizes = [4, 128], strides = [1, 1]} : vector<4x256xf32> to vector<4x128xf32>
    %46 = vector.extract_strided_slice %41 {offsets = [0, 4], sizes = [4, 128], strides = [1, 1]} : vector<4x256xf32> to vector<4x128xf32>
    %47 = vector.extract_strided_slice %41 {offsets = [0, 20], sizes = [4, 128], strides = [1, 1]} : vector<4x256xf32> to vector<4x128xf32>
    %48 = vector.extract_strided_slice %41 {offsets = [0, 21], sizes = [4, 128], strides = [1, 1]} : vector<4x256xf32> to vector<4x128xf32>
    %49 = vector.extract_strided_slice %41 {offsets = [0, 22], sizes = [4, 128], strides = [1, 1]} : vector<4x256xf32> to vector<4x128xf32>
    %50 = vector.extract_strided_slice %41 {offsets = [0, 23], sizes = [4, 128], strides = [1, 1]} : vector<4x256xf32> to vector<4x128xf32>
    %51 = vector.extract_strided_slice %41 {offsets = [0, 24], sizes = [4, 128], strides = [1, 1]} : vector<4x256xf32> to vector<4x128xf32>
    %52 = vector.extract_strided_slice %41 {offsets = [0, 40], sizes = [4, 128], strides = [1, 1]} : vector<4x256xf32> to vector<4x128xf32>
    %53 = vector.extract_strided_slice %41 {offsets = [0, 41], sizes = [4, 128], strides = [1, 1]} : vector<4x256xf32> to vector<4x128xf32>
    %54 = vector.extract_strided_slice %41 {offsets = [0, 42], sizes = [4, 128], strides = [1, 1]} : vector<4x256xf32> to vector<4x128xf32>
    %55 = vector.extract_strided_slice %41 {offsets = [0, 43], sizes = [4, 128], strides = [1, 1]} : vector<4x256xf32> to vector<4x128xf32>
    %56 = vector.extract_strided_slice %41 {offsets = [0, 44], sizes = [4, 128], strides = [1, 1]} : vector<4x256xf32> to vector<4x128xf32>
    %57 = vector.extract_strided_slice %41 {offsets = [0, 60], sizes = [4, 128], strides = [1, 1]} : vector<4x256xf32> to vector<4x128xf32>
    %58 = vector.extract_strided_slice %41 {offsets = [0, 61], sizes = [4, 128], strides = [1, 1]} : vector<4x256xf32> to vector<4x128xf32>
    %59 = vector.extract_strided_slice %41 {offsets = [0, 62], sizes = [4, 128], strides = [1, 1]} : vector<4x256xf32> to vector<4x128xf32>
    %60 = vector.extract_strided_slice %41 {offsets = [0, 63], sizes = [4, 128], strides = [1, 1]} : vector<4x256xf32> to vector<4x128xf32>
    %61 = vector.extract_strided_slice %41 {offsets = [0, 64], sizes = [4, 128], strides = [1, 1]} : vector<4x256xf32> to vector<4x128xf32>
    %62 = vector.extract_strided_slice %41 {offsets = [0, 80], sizes = [4, 128], strides = [1, 1]} : vector<4x256xf32> to vector<4x128xf32>
    %63 = vector.extract_strided_slice %41 {offsets = [0, 81], sizes = [4, 128], strides = [1, 1]} : vector<4x256xf32> to vector<4x128xf32>
    %64 = vector.extract_strided_slice %41 {offsets = [0, 82], sizes = [4, 128], strides = [1, 1]} : vector<4x256xf32> to vector<4x128xf32>
    %65 = vector.extract_strided_slice %41 {offsets = [0, 83], sizes = [4, 128], strides = [1, 1]} : vector<4x256xf32> to vector<4x128xf32>
    %66 = vector.extract_strided_slice %41 {offsets = [0, 84], sizes = [4, 128], strides = [1, 1]} : vector<4x256xf32> to vector<4x128xf32>
    %cst_17 = arith.constant 0.000000e+00 : f32
    %67 = vector.broadcast %cst_17 : f32 to vector<28x128xf32>
    %68 = tpu.concatenate %42, %43, %44, %45, %46, %47, %48, %49, %50, %51, %52, %53, %54, %55, %56, %57 in 0 : vector<4x128xf32>, vector<4x128xf32>, vector<4x128xf32>, vector<4x128xf32>, vector<4x128xf32>, vector<4x128xf32>, vector<4x128xf32>, vector<4x128xf32>, vector<4x128xf32>, vector<4x128xf32>, vector<4x128xf32>, vector<4x128xf32>, vector<4x128xf32>, vector<4x128xf32>, vector<4x128xf32>, vector<4x128xf32> -> vector<64x128xf32>
    %69 = tpu.concatenate %58, %59, %60, %61, %62, %63, %64, %65, %66, %67 in 0 : vector<4x128xf32>, vector<4x128xf32>, vector<4x128xf32>, vector<4x128xf32>, vector<4x128xf32>, vector<4x128xf32>, vector<4x128xf32>, vector<4x128xf32>, vector<4x128xf32>, vector<28x128xf32> -> vector<64x128xf32>
    %70 = tpu.concatenate %68, %69 in 0 : vector<64x128xf32>, vector<64x128xf32> -> vector<128x128xf32>
    %cst_18 = arith.constant dense<0.000000e+00> : vector<8x128xf32>
    %71 = tpu.matmul %6, %70, %cst_18 {dimension_numbers = #tpu.dot_dimension_numbers<[1], [0], [0], [1], [0, 0, 1, 1], [], []>} : vector<8x128xf32>, vector<128x128xf32>, vector<8x128xf32> -> vector<8x128xf32>
    %c0_19 = arith.constant 0 : index
    %c0_20 = arith.constant 0 : index
    %c128_21 = arith.constant 128 : index
    %72 = vector.load %arg5[%c0_19, %c0_20, %c128_21] : memref<1x8x256xf32, #tpu.memory_space<vmem>>, vector<1x8x128xf32>
    %73 = vector.shape_cast %72 : vector<1x8x128xf32> to vector<8x128xf32>
    %74 = vector.shape_cast %71 : vector<8x128xf32> to vector<1x8x128xf32>
    tpu.vector_store %arg5[%c0_19, %c0_20, %c128_21], %74 {strides = array<i32>} : memref<1x8x256xf32, #tpu.memory_space<vmem>>, vector<1x8x128xf32>,
    return
  }
  func.func @transform_0(%arg0: i32, %arg1: i32) -> (i32, i32) {
    %c0_i32 = arith.constant 0 : i32
    %c0_i32_0 = arith.constant 0 : i32
    %c0_i32_1 = arith.constant 0 : i32
    return %c0_i32, %c0_i32_0 : i32, i32
  }
  func.func @transform_1(%arg0: i32, %arg1: i32) -> (i32, i32, i32) {
    %c0_i32 = arith.constant 0 : i32
    %c0_i32_0 = arith.constant 0 : i32
    return %arg0, %c0_i32, %arg1 : i32, i32, i32
  }
  func.func @transform_2(%arg0: i32, %arg1: i32) -> (i32, i32, i32) {
    %c1_i32 = arith.constant 1 : i32
    %0 = arith.addi %arg1, %c1_i32 : i32
    %c2_i32 = arith.constant 2 : i32
    %1 = arith.muli %0, %c2_i32 : i32
    %c0_i32 = arith.constant 0 : i32
    %c0_i32_0 = arith.constant 0 : i32
    return %arg0, %c0_i32, %1 : i32, i32, i32
  }
  func.func @transform_3(%arg0: i32, %arg1: i32) -> (i32, i32, i32) {
    %c0_i32 = arith.constant 0 : i32
    %c0_i32_0 = arith.constant 0 : i32
    return %arg0, %c0_i32, %arg1 : i32, i32, i32
  }
}

</mosaic_0001>

<llo_original>
// kernel: bayesian_gabor2d_forward.1
$region0: #{bayesian_gabor2d_forward.1}
  #allocation0 [shape = 'u32[]', space=smem, size = 0x4, offset = 0x4, fixed_abs, tag = 'smem constant byte address 0x4 - core index']
  #allocation1 [shape = 'u32[144,128]{1,0:T(1,128)}', space=vmem, size = 0x12000, scoped, tag = 'internal scratch']
  #allocation2 [shape = 'f32[4,384]{1,0:T(4,128)}', space=vmem, size = 0x1800, scoped, tag = 'scratch operand']
  %s0 = inlined_call_operand.vmem [shape: f32[8,128], index: 0, kind: input, shape index: {}]
  %s1 = inlined_call_operand.vmem [shape: f32[2,4,640], index: 1, kind: input, shape index: {}, may-alias: {1,2}]
  %s2 = inlined_call_operand.vmem [shape: f32[2,4,640], index: 2, kind: input, shape index: {}, may-alias: {1,2}]
  %s3 = inlined_call_operand.vmem [shape: f32[2,8,512], index: 3, kind: output, shape index: {}]
  %s4 = sld [smem:[#allocation0]]
  $region45: #{bayesian_gabor2d_forward.1} parent=0
    _
  %s6 = ssub.s32 1, %s4
  %s7 = scalar_select 0, %s6, %s4
  loop: start=0, step=1, limit=6
  $region2: #{bayesian_gabor2d_forward.1} parent=0 // loop_pre_header
    _
  $region3: #{bayesian_gabor2d_forward.1} parent=0 // loop_header
    %s9 = sphi 0, %s13
    %p10 = scmp.ge.s32.totalorder %s9, 6
    %s16 = sphi 0, %s28
    %s17 = sphi 0, %s24
    %s18 = sphi 0, %s16
    %s19 = sphi 0, %s17
    %s20 = sphi 0, %s18
    %s21 = sphi 0, %s19
    %s29 = sphi 0, %s29
    %s31 = sphi 0, %s29
    %s32 = sphi 0, %s31
    %s46 = sphi 0, %s32
    %s54 = sphi 0, %s56
    %s57 = sphi 0, %s54
    %s58 = sphi 0, %s57
    %s74 = sphi 0, %s58
    %s86 = sphi 0, %s88
    %s89 = sphi 0, %s86
    %s90 = sphi 0, %s89
    %s106 = sphi 0, %s90
    %s114 = sphi 0, %s116
    %s117 = sphi 0, %s114
    %s118 = sphi 0, %s117
    %s134 = sphi 0, %s118
  $region4: #{bayesian_gabor2d_forward.1} parent=0 // loop_header_branch
    %12 = sbr.rel (%p10) target = $region8
  $region5: #{bayesian_gabor2d_forward.1} parent=0 // loop_body
    %s14 = ssub.s32 %s9, 1
    %s15 = ssub.s32 %s9, 2
    %s22 = sadd.s32 1, %s17
    %p23 = scmp.ge.s32.totalorder %s22, 2
    %s24 = scalar_select %p23, 0, %s22
    %s25 = sadd.s32 1, %s16
    %s26 = scalar_select %p23, %s25, %s16
    %p27 = scmp.ge.s32.totalorder %s26, 2
    %s28 = scalar_select %p27, 0, %s26
    %s30 = sadd.s32 %s29, 1
    %p33 = scmp.eq.s32.totalorder %s9, 3
    %p34 = scmp.ne.s32.totalorder %s29, %s31
    %p35 = scmp.eq.s32.totalorder %s9, 0
    %p36 = por %p34, %p35
    %p37 = scmp.ne.s32.totalorder %s29, %s31
    %p38 = scmp.eq.s32.totalorder %s14, 3
    %p39 = por %p37, %p38
    %p40 = scmp.ne.s32.totalorder %s31, %s32
    %p41 = scmp.eq.s32.totalorder %s14, 0
    %p42 = por %p40, %p41
    %p43 = scmp.ne.s32.totalorder %s31, %s32
    %p44 = scmp.eq.s32.totalorder %s15, 3
    %p45 = por %p43, %p44
    %p47 = scmp.ne.s32.totalorder %s32, %s46
    %p48 = scmp.eq.s32.totalorder %s15, 0
    %p49 = por %p47, %p48
    %s50 = ssub.s32 %s16, %s28
    %s51 = ssub.s32 %s17, %s24
    %s52 = sor.u32 %s50, %s51
    %p53 = scmp.eq.s32.totalorder %s52, 0
    %s55 = sadd.s32 %s54, 1
    %s56 = scalar_select %p53, %s54, %s55
    %p59 = pneg %p53
    %p60 = scmp.eq.s32.totalorder %s9, 3
    %p61 = por %p59, %p60
    %p62 = scmp.ne.s32.totalorder %s54, %s57
    %p63 = scmp.eq.s32.totalorder %s9, 0
    %p64 = por %p62, %p63
    %p65 = scmp.ne.s32.totalorder %s54, %s57
    %p66 = scmp.eq.s32.totalorder %s14, 3
    %p67 = por %p65, %p66
    %p68 = scmp.ne.s32.totalorder %s57, %s58
    %p69 = scmp.eq.s32.totalorder %s14, 0
    %p70 = por %p68, %p69
    %p71 = scmp.ne.s32.totalorder %s57, %s58
    %p72 = scmp.eq.s32.totalorder %s15, 3
    %p73 = por %p71, %p72
    %p75 = scmp.ne.s32.totalorder %s58, %s74
    %p76 = scmp.eq.s32.totalorder %s15, 0
    %p77 = por %p75, %p76
    %s78 = sadd.s32 %s17, 1
    %s79 = smul.u32 %s78, 2
    %s80 = sadd.s32 %s24, 1
    %s81 = smul.u32 %s80, 2
    %s82 = ssub.s32 %s16, %s28
    %s83 = ssub.s32 %s79, %s81
    %s84 = sor.u32 %s82, %s83
    %p85 = scmp.eq.s32.totalorder %s84, 0
    %s87 = sadd.s32 %s86, 1
    %s88 = scalar_select %p85, %s86, %s87
    %p91 = pneg %p85
    %p92 = scmp.eq.s32.totalorder %s9, 3
    %p93 = por %p91, %p92
    %p94 = scmp.ne.s32.totalorder %s86, %s89
    %p95 = scmp.eq.s32.totalorder %s9, 0
    %p96 = por %p94, %p95
    %p97 = scmp.ne.s32.totalorder %s86, %s89
    %p98 = scmp.eq.s32.totalorder %s14, 3
    %p99 = por %p97, %p98
    %p100 = scmp.ne.s32.totalorder %s89, %s90
    %p101 = scmp.eq.s32.totalorder %s14, 0
    %p102 = por %p100, %p101
    %p103 = scmp.ne.s32.totalorder %s89, %s90
    %p104 = scmp.eq.s32.totalorder %s15, 3
    %p105 = por %p103, %p104
    %p107 = scmp.ne.s32.totalorder %s90, %s106
    %p108 = scmp.eq.s32.totalorder %s15, 0
    %p109 = por %p107, %p108
    %s110 = ssub.s32 %s16, %s28
    %s111 = ssub.s32 %s17, %s24
    %s112 = sor.u32 %s110, %s111
    %p113 = scmp.eq.s32.totalorder %s112, 0
    %s115 = sadd.s32 %s114, 1
    %s116 = scalar_select %p113, %s114, %s115
    %p119 = pneg %p113
    %p120 = scmp.eq.s32.totalorder %s9, 3
    %p121 = por %p119, %p120
    %p122 = scmp.ne.s32.totalorder %s114, %s117
    %p123 = scmp.eq.s32.totalorder %s9, 0
    %p124 = por %p122, %p123
    %p125 = scmp.ne.s32.totalorder %s114, %s117
    %p126 = scmp.eq.s32.totalorder %s14, 3
    %p127 = por %p125, %p126
    %p128 = scmp.ne.s32.totalorder %s117, %s118
    %p129 = scmp.eq.s32.totalorder %s14, 0
    %p130 = por %p128, %p129
    %p131 = scmp.ne.s32.totalorder %s117, %s118
    %p132 = scmp.eq.s32.totalorder %s15, 3
    %p133 = por %p131, %p132
    %p135 = scmp.ne.s32.totalorder %s118, %s134
    %p136 = scmp.eq.s32.totalorder %s15, 0
    %p137 = por %p135, %p136
    %p138 = scmp.le.s32.totalorder 1, %s9
    %p139 = scmp.lt.s32.totalorder %s9, 5
    %p140 = pnand %p138, %p139
    %p141 = pneg %p140
    // Predicated region
    $region9: #{bayesian_gabor2d_forward.1} parent=5 // pred_check
      _
    $region10: #{bayesian_gabor2d_forward.1} parent=5 // pred_check_branch
      %143 = sbr.rel (%p140) target = $region12
    $region11: #{bayesian_gabor2d_forward.1} parent=5 // pred_region
      %s144 = ssub.s32 %s9, 1
      // Predicated region
      $region13: #{bayesian_gabor2d_forward.1} parent=11 // pred_check
        %p145 = pneg %p42
      $region14: #{bayesian_gabor2d_forward.1} parent=11 // pred_check_branch
        %147 = sbr.rel (%p145) target = $region16
      $region15: #{bayesian_gabor2d_forward.1} parent=11 // pred_region
        _
      $region16: #{bayesian_gabor2d_forward.1} parent=11 // pred_fallthru
        _
    $region12: #{bayesian_gabor2d_forward.1} parent=5 // pred_fallthru
      _
    %p148 = scmp.lt.s32.totalorder %s9, 4
    // Predicated region
    $region17: #{bayesian_gabor2d_forward.1} parent=5 // pred_check
      %p149 = pneg %p148
    $region18: #{bayesian_gabor2d_forward.1} parent=5 // pred_check_branch
      %151 = sbr.rel (%p149) target = $region20
    $region19: #{bayesian_gabor2d_forward.1} parent=5 // pred_region
      // Predicated region
      $region21: #{bayesian_gabor2d_forward.1} parent=19 // pred_check
        %p152 = pneg %p64
      $region22: #{bayesian_gabor2d_forward.1} parent=19 // pred_check_branch
        %154 = sbr.rel (%p152) target = $region24
      $region23: #{bayesian_gabor2d_forward.1} parent=19 // pred_region
        %s155 = smul.u32 2, %s17
        %s156 = ssub.s32 5, %s155
        %p157 = scmp.lt.s32.totalorder %s156, 2
        %s158 = scalar_select %p157, %s156, 2
        %s159 = smul.u32 64, %s158
        %p160 = scmp.lt.s32.totalorder %s16, 1
        %s161 = scalar_select %p160, %s16, 1
        %p162 = scmp.lt.s32.totalorder %s155, 4
        %s163 = scalar_select %p162, %s155, 4
        %s164 = smul.addr %s161, 5
        %s165 = sadd.s32 %s163, %s164
        %s166 = smul.addr %s165, 4
        %s167 = scalar_lea.vmem %s1, %s166
        %s168 = smul.u32 2, %s17
        %s169 = ssub.s32 5, %s168
        %p170 = scmp.lt.s32.totalorder %s169, 2
        %s171 = scalar_select %p170, %s169, 2
        %s172 = smul.u32 64, %s171
      $region24: #{bayesian_gabor2d_forward.1} parent=19 // pred_fallthru
        _
      // Predicated region
      $region25: #{bayesian_gabor2d_forward.1} parent=19 // pred_check
        %p173 = pneg %p96
      $region26: #{bayesian_gabor2d_forward.1} parent=19 // pred_check_branch
        %175 = sbr.rel (%p173) target = $region28
      $region27: #{bayesian_gabor2d_forward.1} parent=19 // pred_region
        %s176 = sadd.s32 %s17, 1
        %s177 = smul.u32 %s176, 2
        %p178 = scmp.lt.s32.totalorder %s16, 1
        %s179 = scalar_select %p178, %s16, 1
        %p180 = scmp.lt.s32.totalorder %s177, 4
        %s181 = scalar_select %p180, %s177, 4
        %s182 = smul.addr %s179, 5
        %s183 = sadd.s32 %s181, %s182
        %s184 = smul.addr %s183, 4
        %s185 = scalar_lea.vmem %s2, %s184
        %s186 = sadd.s32 %s17, 1
        %s187 = smul.u32 %s186, 2
      $region28: #{bayesian_gabor2d_forward.1} parent=19 // pred_fallthru
        _
    $region20: #{bayesian_gabor2d_forward.1} parent=5 // pred_fallthru
      _
    %p188 = scmp.le.s32.totalorder 1, %s9
    %p189 = scmp.lt.s32.totalorder %s9, 5
    %p190 = pnand %p188, %p189
    %p191 = pneg %p190
    // Predicated region
    $region29: #{bayesian_gabor2d_forward.1} parent=5 // pred_check
      _
    $region30: #{bayesian_gabor2d_forward.1} parent=5 // pred_check_branch
      %193 = sbr.rel (%p190) target = $region32
    $region31: #{bayesian_gabor2d_forward.1} parent=5 // pred_region
      %s194 = ssub.s32 %s9, 1
      %p195 = pneg %p42
      %p196 = pneg %p39
      %s197 = smul.u32 2, %s19
      %s198 = ssub.s32 5, %s197
      %p199 = scmp.lt.s32.totalorder %s198, 2
      %s200 = scalar_select %p199, %s198, 2
      %s201 = smul.u32 64, %s200
      %p202 = scmp.lt.s32.totalorder %s18, 1
      %s203 = scalar_select %p202, %s18, 1
      %p204 = scmp.lt.s32.totalorder %s197, 4
      %s205 = scalar_select %p204, %s197, 4
      %s206 = smul.addr %s203, 5
      %s207 = sadd.s32 %s205, %s206
      %s208 = smul.addr %s207, 4
      %s209 = scalar_lea.vmem %s1, %s208
      %p210 = pneg %p70
      %p211 = pneg %p67
      %s212 = sadd.s32 %s19, 1
      %s213 = smul.u32 %s212, 2
      %p214 = scmp.lt.s32.totalorder %s18, 1
      %s215 = scalar_select %p214, %s18, 1
      %p216 = scmp.lt.s32.totalorder %s213, 4
      %s217 = scalar_select %p216, %s213, 4
      %s218 = smul.addr %s215, 5
      %s219 = sadd.s32 %s217, %s218
      %s220 = smul.addr %s219, 4
      %s221 = scalar_lea.vmem %s2, %s220
      %p222 = pneg %p102
      %p223 = pneg %p99
      %p224 = pneg %p130
      %p225 = pneg %p127
      %s226 = smul.u32 2, %s19
      %p227 = scmp.lt.s32.totalorder %s18, 1
      %s228 = scalar_select %p227, %s18, 1
      %p229 = scmp.lt.s32.totalorder %s226, 3
      %s230 = scalar_select %p229, %s226, 3
      %s231 = smul.addr %s228, 4
      %s232 = sadd.s32 %s230, %s231
      %s233 = smul.addr %s232, 8
      %s234 = scalar_lea.vmem %s3, %s233
      %s235 = smul.u32 2, %s19
      %s236 = ssub.s32 5, %s235
      %p237 = scmp.lt.s32.totalorder %s236, 2
      %s238 = scalar_select %p237, %s236, 2
      %s239 = smul.u32 64, %s238
      %p240 = scmp.lt.s32.totalorder %s18, 1
      %s241 = scalar_select %p240, %s18, 1
      %p242 = scmp.lt.s32.totalorder %s235, 4
      %s243 = scalar_select %p242, %s235, 4
      %s244 = smul.addr %s241, 5
      %s245 = sadd.s32 %s243, %s244
      %s246 = smul.addr %s245, 4
      %s247 = scalar_lea.vmem %s1, %s246
      %s248 = smul.u32 2, %s19
      %s249 = ssub.s32 5, %s248
      %p250 = scmp.lt.s32.totalorder %s249, 2
      %s251 = scalar_select %p250, %s249, 2
      %s252 = smul.u32 64, %s251
      %s253 = sadd.s32 %s19, 1
      %s254 = smul.u32 %s253, 2
      %p255 = scmp.lt.s32.totalorder %s18, 1
      %s256 = scalar_select %p255, %s18, 1
      %p257 = scmp.lt.s32.totalorder %s254, 4
      %s258 = scalar_select %p257, %s254, 4
      %s259 = smul.addr %s256, 5
      %s260 = sadd.s32 %s258, %s259
      %s261 = smul.addr %s260, 4
      %s262 = scalar_lea.vmem %s2, %s261
      %s263 = sadd.s32 %s19, 1
      %s264 = smul.u32 %s263, 2
      %s265 = smul.u32 2, %s19
      %p266 = scmp.lt.s32.totalorder %s18, 1
      %s267 = scalar_select %p266, %s18, 1
      %p268 = scmp.lt.s32.totalorder %s265, 3
      %s269 = scalar_select %p268, %s265, 3
      %s270 = smul.addr %s267, 4
      %s271 = sadd.s32 %s269, %s270
      %s272 = smul.addr %s271, 8
      %s273 = scalar_lea.vmem %s3, %s272
      %s274 = smul.u32 2, %s19
      %v275 = vld [vmem:[%s247] sm:$0xff]
      %276 = vst [vmem:[#allocation2] sm:$0xff] %v275
      %v277 = vld [vmem:[%s262] sm:$0xf]
      %278 = vst [vmem:[#allocation2 + $0x8] sm:$0xf] %v277
      %v279 = vld [vmem:[%s0] sm:$0xff]
      %v280 = vld [vmem:[#allocation2] sm:$0xff]
      %v282 = vcombine.low %v280, %v280
      %283 = vrot.lane.b32.xlu0 %v282, 127
      %v284 = vpop.permute.xlu0 %283
      %285 = vrot.lane.b32.xlu0 %v280, 127
      %v286 = vpop.permute.xlu0 %285
      %vm287 = vcmask 1039360
      %v288 = vsel %vm287, %v284, %v286
      %v290 = vcombine.high %v280, %v280
      %291 = vrot.lane.b32.xlu0 %v280, 126
      %v292 = vpop.permute.xlu0 %291
      %293 = vrot.lane.b32.xlu0 %v290, 126
      %v294 = vpop.permute.xlu0 %293
      %vm295 = vcmask 1031168
      %v296 = vsel %vm295, %v292, %v294
      %298 = vrot.lane.b32.xlu0 %v282, 125
      %v299 = vpop.permute.xlu0 %298
      %300 = vrot.lane.b32.xlu0 %v280, 125
      %v301 = vpop.permute.xlu0 %300
      %vm302 = vcmask 1022976
      %v303 = vsel %vm302, %v299, %v301
      %305 = vrot.lane.b32.xlu0 %v280, 124
      %v306 = vpop.permute.xlu0 %305
      %307 = vrot.lane.b32.xlu0 %v290, 124
      %v308 = vpop.permute.xlu0 %307
      %vm309 = vcmask 1014784
      %v310 = vsel %vm309, %v306, %v308
      %312 = vrot.lane.b32.xlu0 %v282, 108
      %v313 = vpop.permute.xlu0 %312
      %314 = vrot.lane.b32.xlu0 %v280, 108
      %v315 = vpop.permute.xlu0 %314
      %vm316 = vcmask 883712
      %v317 = vsel %vm316, %v313, %v315
      %319 = vrot.lane.b32.xlu0 %v280, 107
      %v320 = vpop.permute.xlu0 %319
      %321 = vrot.lane.b32.xlu0 %v290, 107
      %v322 = vpop.permute.xlu0 %321
      %vm323 = vcmask 875520
      %v324 = vsel %vm323, %v320, %v322
      %326 = vrot.lane.b32.xlu0 %v282, 106
      %v327 = vpop.permute.xlu0 %326
      %328 = vrot.lane.b32.xlu0 %v280, 106
      %v329 = vpop.permute.xlu0 %328
      %vm330 = vcmask 867328
      %v331 = vsel %vm330, %v327, %v329
      %333 = vrot.lane.b32.xlu0 %v280, 105
      %v334 = vpop.permute.xlu0 %333
      %335 = vrot.lane.b32.xlu0 %v290, 105
      %v336 = vpop.permute.xlu0 %335
      %vm337 = vcmask 859136
      %v338 = vsel %vm337, %v334, %v336
      %340 = vrot.lane.b32.xlu0 %v282, 104
      %v341 = vpop.permute.xlu0 %340
      %342 = vrot.lane.b32.xlu0 %v280, 104
      %v343 = vpop.permute.xlu0 %342
      %vm344 = vcmask 850944
      %v345 = vsel %vm344, %v341, %v343
      %347 = vrot.lane.b32.xlu0 %v280, 88
      %v348 = vpop.permute.xlu0 %347
      %349 = vrot.lane.b32.xlu0 %v290, 88
      %v350 = vpop.permute.xlu0 %349
      %vm351 = vcmask 719872
      %v352 = vsel %vm351, %v348, %v350
      %354 = vrot.lane.b32.xlu0 %v282, 87
      %v355 = vpop.permute.xlu0 %354
      %356 = vrot.lane.b32.xlu0 %v280, 87
      %v357 = vpop.permute.xlu0 %356
      %vm358 = vcmask 711680
      %v359 = vsel %vm358, %v355, %v357
      %361 = vrot.lane.b32.xlu0 %v280, 86
      %v362 = vpop.permute.xlu0 %361
      %363 = vrot.lane.b32.xlu0 %v290, 86
      %v364 = vpop.permute.xlu0 %363
      %vm365 = vcmask 703488
      %v366 = vsel %vm365, %v362, %v364
      %368 = vrot.lane.b32.xlu0 %v282, 85
      %v369 = vpop.permute.xlu0 %368
      %370 = vrot.lane.b32.xlu0 %v280, 85
      %v371 = vpop.permute.xlu0 %370
      %vm372 = vcmask 695296
      %v373 = vsel %vm372, %v369, %v371
      %375 = vrot.lane.b32.xlu0 %v280, 84
      %v376 = vpop.permute.xlu0 %375
      %377 = vrot.lane.b32.xlu0 %v290, 84
      %v378 = vpop.permute.xlu0 %377
      %vm379 = vcmask 687104
      %v380 = vsel %vm379, %v376, %v378
      %382 = vrot.lane.b32.xlu0 %v282, 68
      %v383 = vpop.permute.xlu0 %382
      %384 = vrot.lane.b32.xlu0 %v280, 68
      %v385 = vpop.permute.xlu0 %384
      %vm386 = vcmask 556032
      %v387 = vsel %vm386, %v383, %v385
      %vm389 = vcmask 1043456
      %v390 = vsel %vm389, %v280, %v288
      %v391 = vsel %vm389, %v296, %v303
      %v392 = vsel %vm389, %v310, %v317
      %v393 = vsel %vm389, %v324, %v331
      %v394 = vsel %vm389, %v338, %v345
      %v395 = vsel %vm389, %v352, %v359
      %v396 = vsel %vm389, %v366, %v373
      %v397 = vsel %vm389, %v380, %v387
      %402 = vrot.lane.b32.xlu0 %v280, 109
      %v403 = vpop.permute.xlu0 %402
      %404 = vrot.lane.b32.xlu0 %v290, 109
      %v405 = vpop.permute.xlu0 %404
      %vm406 = vcmask 891904
      %v407 = vsel %vm406, %v403, %v405
      %v414 = vsel %vm389, %v290, %v286
      %v415 = vsel %vm389, %v294, %v301
      %v416 = vsel %vm389, %v407, %v317
      %v417 = vsel %vm389, %v405, %v315
      %v418 = vsel %vm389, %v322, %v329
      %v419 = vsel %vm389, %v338, 0.0
      %v420 = vsel %vm389, %v336, 0.0
      %432 = vrot.lane.b32.xlu0 %v390, 67
      %v433 = vpop.permute.xlu0 %432
      %434 = vrot.lane.b32.xlu0 %v414, 67
      %v435 = vpop.permute.xlu0 %434
      %436 = vrot.lane.b32.xlu0 %v391, 67
      %v437 = vpop.permute.xlu0 %436
      %438 = vrot.lane.b32.xlu0 %v415, 67
      %v439 = vpop.permute.xlu0 %438
      %440 = vrot.lane.b32.xlu0 %v416, 67
      %v441 = vpop.permute.xlu0 %440
      %442 = vrot.lane.b32.xlu0 %v417, 67
      %v443 = vpop.permute.xlu0 %442
      %444 = vrot.lane.b32.xlu0 %v393, 67
      %v445 = vpop.permute.xlu0 %444
      %446 = vrot.lane.b32.xlu0 %v418, 67
      %v447 = vpop.permute.xlu0 %446
      %448 = vrot.lane.b32.xlu0 %v419, 67
      %v449 = vpop.permute.xlu0 %448
      %450 = vrot.lane.b32.xlu0 %v420, 67
      %v451 = vpop.permute.xlu0 %450
      %452 = vrot.lane.b32.xlu0 0.0, 67
      %v453 = vpop.permute.xlu0 %452
      %vm454 = vcmask 547840
      %v455 = vsel %vm454, %v433, %v435
      %v456 = vsel %vm454, %v437, %v439
      %v457 = vsel %vm454, %v441, %v443
      %v458 = vsel %vm454, %v445, %v447
      %v459 = vsel %vm454, %v449, %v451
      %466 = vmatprep.subr.mxu0 0.0
      %467 = vmatpush1.msra.mxu0 %v453
      %468 = vmatprep.subr.mxu0 0.0
      %469 = vmatpush1.msra.mxu0 %v453
      %470 = vmatprep.subr.mxu0 0.0
      %471 = vmatpush1.msra.mxu0 %v453
      %472 = vmatprep.subr.mxu0 0.0
      %473 = vmatpush1.msra.mxu0 %v459
      %474 = vmatprep.subr.mxu0 0.0
      %475 = vmatpush1.msra.mxu0 %v458
      %476 = vmatprep.subr.mxu0 0.0
      %477 = vmatpush1.msra.mxu0 %v457
      %478 = vmatprep.subr.mxu0 0.0
      %479 = vmatpush1.msra.mxu0 %v456
      %480 = vmatprep.subr.mxu0 0.0
      %481 = vmatpush1.msra.mxu0 %v455
      %482 = vmatprep.subr.mxu0 0.0
      %483 = vmatpush1.msra.mxu0 %v397
      %484 = vmatprep.subr.mxu0 0.0
      %485 = vmatpush1.msra.mxu0 %v396
      %486 = vmatprep.subr.mxu0 0.0
      %487 = vmatpush1.msra.mxu0 %v395
      %488 = vmatprep.subr.mxu0 0.0
      %489 = vmatpush1.msra.mxu0 %v394
      %490 = vmatprep.subr.mxu0 0.0
      %491 = vmatpush1.msra.mxu0 %v393
      %492 = vmatprep.subr.mxu0 0.0
      %493 = vmatpush1.msra.mxu0 %v392
      %494 = vmatprep.subr.mxu0 0.0
      %495 = vmatpush1.msra.mxu0 %v391
      %496 = vmatprep.subr.mxu0 0.0
      %497 = vmatpush1.msra.mxu0 %v390
      %498 = vmatprep.subr.mxu0 0.0
      %499 = vmatpush2.msra.mxu0 0.0
      %500 = vmatprep.subr.mxu0 0.0
      %501 = vmatpush2.msra.mxu0 0.0
      %502 = vmatprep.subr.mxu0 0.0
      %503 = vmatpush2.msra.mxu0 0.0
      %504 = vmatprep.subr.mxu0 0.0
      %505 = vmatpush2.msra.mxu0 0.0
      %506 = vmatprep.subr.mxu0 0.0
      %507 = vmatpush2.msra.mxu0 0.0
      %508 = vmatprep.subr.mxu0 0.0
      %509 = vmatpush2.msra.mxu0 0.0
      %510 = vmatprep.subr.mxu0 0.0
      %511 = vmatpush2.msra.mxu0 0.0
      %512 = vmatprep.subr.mxu0 0.0
      %513 = vmatpush2.msra.mxu0 0.0
      %514 = vmatprep.subr.mxu0 0.0
      %515 = vmatpush2.msra.mxu0 0.0
      %516 = vmatprep.subr.mxu0 0.0
      %517 = vmatpush2.msra.mxu0 0.0
      %518 = vmatprep.subr.mxu0 0.0
      %519 = vmatpush2.msra.mxu0 0.0
      %520 = vmatprep.subr.mxu0 0.0
      %521 = vmatpush2.msra.mxu0 0.0
      %522 = vmatprep.subr.mxu0 0.0
      %523 = vmatpush2.msra.mxu0 0.0
      %524 = vmatprep.subr.mxu0 0.0
      %525 = vmatpush2.msra.mxu0 0.0
      %526 = vmatprep.subr.mxu0 0.0
      %527 = vmatpush2.msra.mxu0 0.0
      %528 = vmatprep.subr.mxu0 0.0
      %529 = vmatpush2.msra.mxu0 0.0
      %530 = vmatprep.mubr.f32.mxu0 0.0
      %531 = vmatmul.mubr.f32.gmra.mxu0 %v279
      %v532 = vpop.f32.mrf.mxu0
      %v533 = vadd.f32 0.0, %v532
      %v534 = vpop.f32.mrf.mxu0
      %535 = vdwg.mxu0
      %536 = vst [vmem:[%s273] sm:$0xff] %v533
      %v537 = vld [vmem:[#allocation2 + $0x4] sm:$0xff]
      %v539 = vcombine.low %v537, %v537
      %540 = vrot.lane.b32.xlu0 %v539, 127
      %v541 = vpop.permute.xlu0 %540
      %542 = vrot.lane.b32.xlu0 %v537, 127
      %v543 = vpop.permute.xlu0 %542
      %v544 = vsel %vm287, %v541, %v543
      %v546 = vcombine.high %v537, %v537
      %547 = vrot.lane.b32.xlu0 %v537, 126
      %v548 = vpop.permute.xlu0 %547
      %549 = vrot.lane.b32.xlu0 %v546, 126
      %v550 = vpop.permute.xlu0 %549
      %v551 = vsel %vm295, %v548, %v550
      %553 = vrot.lane.b32.xlu0 %v539, 125
      %v554 = vpop.permute.xlu0 %553
      %555 = vrot.lane.b32.xlu0 %v537, 125
      %v556 = vpop.permute.xlu0 %555
      %v557 = vsel %vm302, %v554, %v556
      %559 = vrot.lane.b32.xlu0 %v537, 124
      %v560 = vpop.permute.xlu0 %559
      %561 = vrot.lane.b32.xlu0 %v546, 124
      %v562 = vpop.permute.xlu0 %561
      %v563 = vsel %vm309, %v560, %v562
      %565 = vrot.lane.b32.xlu0 %v539, 108
      %v566 = vpop.permute.xlu0 %565
      %567 = vrot.lane.b32.xlu0 %v537, 108
      %v568 = vpop.permute.xlu0 %567
      %v569 = vsel %vm316, %v566, %v568
      %571 = vrot.lane.b32.xlu0 %v537, 107
      %v572 = vpop.permute.xlu0 %571
      %573 = vrot.lane.b32.xlu0 %v546, 107
      %v574 = vpop.permute.xlu0 %573
      %v575 = vsel %vm323, %v572, %v574
      %577 = vrot.lane.b32.xlu0 %v539, 106
      %v578 = vpop.permute.xlu0 %577
      %579 = vrot.lane.b32.xlu0 %v537, 106
      %v580 = vpop.permute.xlu0 %579
      %v581 = vsel %vm330, %v578, %v580
      %583 = vrot.lane.b32.xlu0 %v537, 105
      %v584 = vpop.permute.xlu0 %583
      %585 = vrot.lane.b32.xlu0 %v546, 105
      %v586 = vpop.permute.xlu0 %585
      %v587 = vsel %vm337, %v584, %v586
      %589 = vrot.lane.b32.xlu0 %v539, 104
      %v590 = vpop.permute.xlu0 %589
      %591 = vrot.lane.b32.xlu0 %v537, 104
      %v592 = vpop.permute.xlu0 %591
      %v593 = vsel %vm344, %v590, %v592
      %595 = vrot.lane.b32.xlu0 %v537, 88
      %v596 = vpop.permute.xlu0 %595
      %597 = vrot.lane.b32.xlu0 %v546, 88
      %v598 = vpop.permute.xlu0 %597
      %v599 = vsel %vm351, %v596, %v598
      %601 = vrot.lane.b32.xlu0 %v539, 87
      %v602 = vpop.permute.xlu0 %601
      %603 = vrot.lane.b32.xlu0 %v537, 87
      %v604 = vpop.permute.xlu0 %603
      %v605 = vsel %vm358, %v602, %v604
      %607 = vrot.lane.b32.xlu0 %v537, 86
      %v608 = vpop.permute.xlu0 %607
      %609 = vrot.lane.b32.xlu0 %v546, 86
      %v610 = vpop.permute.xlu0 %609
      %v611 = vsel %vm365, %v608, %v610
      %613 = vrot.lane.b32.xlu0 %v539, 85
      %v614 = vpop.permute.xlu0 %613
      %615 = vrot.lane.b32.xlu0 %v537, 85
      %v616 = vpop.permute.xlu0 %615
      %v617 = vsel %vm372, %v614, %v616
      %619 = vrot.lane.b32.xlu0 %v537, 84
      %v620 = vpop.permute.xlu0 %619
      %621 = vrot.lane.b32.xlu0 %v546, 84
      %v622 = vpop.permute.xlu0 %621
      %v623 = vsel %vm379, %v620, %v622
      %625 = vrot.lane.b32.xlu0 %v539, 68
      %v626 = vpop.permute.xlu0 %625
      %627 = vrot.lane.b32.xlu0 %v537, 68
      %v628 = vpop.permute.xlu0 %627
      %v629 = vsel %vm386, %v626, %v628
      %v631 = vsel %vm389, %v537, %v544
      %v632 = vsel %vm389, %v551, %v557
      %v633 = vsel %vm389, %v563, %v569
      %v634 = vsel %vm389, %v575, %v581
      %v635 = vsel %vm389, %v587, %v593
      %v636 = vsel %vm389, %v599, %v605
      %v637 = vsel %vm389, %v611, %v617
      %v638 = vsel %vm389, %v623, %v629
      %643 = vrot.lane.b32.xlu0 %v537, 109
      %v644 = vpop.permute.xlu0 %643
      %645 = vrot.lane.b32.xlu0 %v546, 109
      %v646 = vpop.permute.xlu0 %645
      %v647 = vsel %vm406, %v644, %v646
      %v654 = vsel %vm389, %v546, %v543
      %v655 = vsel %vm389, %v550, %v556
      %v656 = vsel %vm389, %v647, %v569
      %v657 = vsel %vm389, %v646, %v568
      %v658 = vsel %vm389, %v574, %v580
      %v659 = vsel %vm389, %v587, 0.0
      %v660 = vsel %vm389, %v586, 0.0
      %671 = vrot.lane.b32.xlu0 %v631, 67
      %v672 = vpop.permute.xlu0 %671
      %673 = vrot.lane.b32.xlu0 %v654, 67
      %v674 = vpop.permute.xlu0 %673
      %675 = vrot.lane.b32.xlu0 %v632, 67
      %v676 = vpop.permute.xlu0 %675
      %677 = vrot.lane.b32.xlu0 %v655, 67
      %v678 = vpop.permute.xlu0 %677
      %679 = vrot.lane.b32.xlu0 %v656, 67
      %v680 = vpop.permute.xlu0 %679
      %681 = vrot.lane.b32.xlu0 %v657, 67
      %v682 = vpop.permute.xlu0 %681
      %683 = vrot.lane.b32.xlu0 %v634, 67
      %v684 = vpop.permute.xlu0 %683
      %685 = vrot.lane.b32.xlu0 %v658, 67
      %v686 = vpop.permute.xlu0 %685
      %687 = vrot.lane.b32.xlu0 %v659, 67
      %v688 = vpop.permute.xlu0 %687
      %689 = vrot.lane.b32.xlu0 %v660, 67
      %v690 = vpop.permute.xlu0 %689
      %v691 = vsel %vm454, %v672, %v674
      %v692 = vsel %vm454, %v676, %v678
      %v693 = vsel %vm454, %v680, %v682
      %v694 = vsel %vm454, %v684, %v686
      %v695 = vsel %vm454, %v688, %v690
      %701 = vmatprep.subr.mxu0 0.0
      %702 = vmatpush1.msra.mxu0 %v453
      %703 = vmatprep.subr.mxu0 0.0
      %704 = vmatpush1.msra.mxu0 %v453
      %705 = vmatprep.subr.mxu0 0.0
      %706 = vmatpush1.msra.mxu0 %v453
      %707 = vmatprep.subr.mxu0 0.0
      %708 = vmatpush1.msra.mxu0 %v695
      %709 = vmatprep.subr.mxu0 0.0
      %710 = vmatpush1.msra.mxu0 %v694
      %711 = vmatprep.subr.mxu0 0.0
      %712 = vmatpush1.msra.mxu0 %v693
      %713 = vmatprep.subr.mxu0 0.0
      %714 = vmatpush1.msra.mxu0 %v692
      %715 = vmatprep.subr.mxu0 0.0
      %716 = vmatpush1.msra.mxu0 %v691
      %717 = vmatprep.subr.mxu0 0.0
      %718 = vmatpush1.msra.mxu0 %v638
      %719 = vmatprep.subr.mxu0 0.0
      %720 = vmatpush1.msra.mxu0 %v637
      %721 = vmatprep.subr.mxu0 0.0
      %722 = vmatpush1.msra.mxu0 %v636
      %723 = vmatprep.subr.mxu0 0.0
      %724 = vmatpush1.msra.mxu0 %v635
      %725 = vmatprep.subr.mxu0 0.0
      %726 = vmatpush1.msra.mxu0 %v634
      %727 = vmatprep.subr.mxu0 0.0
      %728 = vmatpush1.msra.mxu0 %v633
      %729 = vmatprep.subr.mxu0 0.0
      %730 = vmatpush1.msra.mxu0 %v632
      %731 = vmatprep.subr.mxu0 0.0
      %732 = vmatpush1.msra.mxu0 %v631
      %733 = vmatprep.subr.mxu0 0.0
      %734 = vmatpush2.msra.mxu0 0.0
      %735 = vmatprep.subr.mxu0 0.0
      %736 = vmatpush2.msra.mxu0 0.0
      %737 = vmatprep.subr.mxu0 0.0
      %738 = vmatpush2.msra.mxu0 0.0
      %739 = vmatprep.subr.mxu0 0.0
      %740 = vmatpush2.msra.mxu0 0.0
      %741 = vmatprep.subr.mxu0 0.0
      %742 = vmatpush2.msra.mxu0 0.0
      %743 = vmatprep.subr.mxu0 0.0
      %744 = vmatpush2.msra.mxu0 0.0
      %745 = vmatprep.subr.mxu0 0.0
      %746 = vmatpush2.msra.mxu0 0.0
      %747 = vmatprep.subr.mxu0 0.0
      %748 = vmatpush2.msra.mxu0 0.0
      %749 = vmatprep.subr.mxu0 0.0
      %750 = vmatpush2.msra.mxu0 0.0
      %751 = vmatprep.subr.mxu0 0.0
      %752 = vmatpush2.msra.mxu0 0.0
      %753 = vmatprep.subr.mxu0 0.0
      %754 = vmatpush2.msra.mxu0 0.0
      %755 = vmatprep.subr.mxu0 0.0
      %756 = vmatpush2.msra.mxu0 0.0
      %757 = vmatprep.subr.mxu0 0.0
      %758 = vmatpush2.msra.mxu0 0.0
      %759 = vmatprep.subr.mxu0 0.0
      %760 = vmatpush2.msra.mxu0 0.0
      %761 = vmatprep.subr.mxu0 0.0
      %762 = vmatpush2.msra.mxu0 0.0
      %763 = vmatprep.subr.mxu0 0.0
      %764 = vmatpush2.msra.mxu0 0.0
      %765 = vmatprep.mubr.f32.mxu0 0.0
      %766 = vmatmul.mubr.f32.gmra.mxu0 %v279
      %v767 = vpop.f32.mrf.mxu0
      %v768 = vadd.f32 0.0, %v767
      %v769 = vpop.f32.mrf.mxu0
      %770 = vdwg.mxu0
      %771 = vst [vmem:[%s273 + $0x8] sm:$0xff] %v768
      %s772 = smul.u32 2, %s19
      %p773 = scmp.lt.s32.totalorder %s18, 1
      %s774 = scalar_select %p773, %s18, 1
      %p775 = scmp.lt.s32.totalorder %s772, 3
      %s776 = scalar_select %p775, %s772, 3
      %s777 = smul.addr %s774, 4
      %s778 = sadd.s32 %s776, %s777
      %s779 = smul.addr %s778, 8
      %s780 = scalar_lea.vmem %s3, %s779
      // Predicated region
      $region33: #{bayesian_gabor2d_forward.1} parent=31 // pred_check
        %p781 = pneg %p127
      $region34: #{bayesian_gabor2d_forward.1} parent=31 // pred_check_branch
        %783 = sbr.rel (%p781) target = $region36
      $region35: #{bayesian_gabor2d_forward.1} parent=31 // pred_region
        %s784 = smul.u32 2, %s19
      $region36: #{bayesian_gabor2d_forward.1} parent=31 // pred_fallthru
        _
    $region32: #{bayesian_gabor2d_forward.1} parent=5 // pred_fallthru
      _
    %p785 = scmp.le.s32.totalorder 2, %s9
    // Predicated region
    $region37: #{bayesian_gabor2d_forward.1} parent=5 // pred_check
      %p786 = pneg %p785
    $region38: #{bayesian_gabor2d_forward.1} parent=5 // pred_check_branch
      %788 = sbr.rel (%p786) target = $region40
    $region39: #{bayesian_gabor2d_forward.1} parent=5 // pred_region
      %s789 = ssub.s32 %s9, 2
      // Predicated region
      $region41: #{bayesian_gabor2d_forward.1} parent=39 // pred_check
        %p790 = pneg %p133
      $region42: #{bayesian_gabor2d_forward.1} parent=39 // pred_check_branch
        %792 = sbr.rel (%p790) target = $region44
      $region43: #{bayesian_gabor2d_forward.1} parent=39 // pred_region
        %s793 = smul.u32 2, %s21
        %p794 = scmp.lt.s32.totalorder %s20, 1
        %s795 = scalar_select %p794, %s20, 1
        %p796 = scmp.lt.s32.totalorder %s793, 3
        %s797 = scalar_select %p796, %s793, 3
        %s798 = smul.addr %s795, 4
        %s799 = sadd.s32 %s797, %s798
        %s800 = smul.addr %s799, 8
        %s801 = scalar_lea.vmem %s3, %s800
      $region44: #{bayesian_gabor2d_forward.1} parent=39 // pred_fallthru
        _
    $region40: #{bayesian_gabor2d_forward.1} parent=5 // pred_fallthru
      _
  $region6: #{bayesian_gabor2d_forward.1} parent=0 // loop_footer
    %s13 = sadd.s32 1, %s9
  $region7: #{bayesian_gabor2d_forward.1} parent=0 // loop_footer_branch
    %8 = sbr.rel target = $region3
  $region8: #{bayesian_gabor2d_forward.1} parent=0 // loop_exit
    _

</llo_original>
